<compile_context>
chip_gen: v6e
topology: v6e:2x2x1
jax: 0.10.0
libtpu: 0.0.40
codegen_flags: <defaults>
</compile_context>

<pallas_src>
import functools

import jax
import jax.numpy as jnp
from jax.experimental import pallas as pl
from jax.experimental.pallas import tpu as pltpu

# ~2 MiB of f32 per pipeline buffer, independent of the chosen lane width.
_TILE_ELEMS = 512 * 1024
# Candidate lane-dense widths (all multiples of 128); widest preferred.
_WIDTHS = (1024, 512, 256, 128)
# Below this element count the fixed pallas_call / per-grid-step overhead
# dominates; the fused jnp chain is at least as fast.
_MIN_PALLAS_ELEMENTS = 1 << 20


def _weighted_mae_kernel(pred_ref, tgt_ref, out_ref, *, epsilon, only_target_based):
    p = pred_ref[...]
    t = tgt_ref[...]
    if only_target_based:
        weight = t + epsilon
    else:
        weight = jnp.maximum(p, t) + epsilon
    out_ref[...] = weight * jnp.abs(p - t)


def _weighted_mae_jnp(prediction, target, *, epsilon, only_target_based):
    if only_target_based:
        weight = target + epsilon
    else:
        weight = jnp.maximum(prediction, target) + epsilon
    return weight * jnp.abs(prediction - target)


def weighted_mae_loss(
    prediction,
    target,
    *,
    epsilon=0.1,
    only_target_based=False,
    min_pallas_elements=_MIN_PALLAS_ELEMENTS,
    tile_elems=_TILE_ELEMS,
):
    """Elementwise weighted MAE loss (no reduction).

    Returns an array with the same shape and dtype as `prediction`, matching
    the PyTorch `WeightedMAELoss.forward` semantics.
    """
    assert prediction.shape == target.shape, "prediction/target shape mismatch"
    orig_shape = prediction.shape
    dtype = prediction.dtype
    total = prediction.size

    # Widest lane-dense column width that evenly divides the element count.
    width = next((w for w in _WIDTHS if total % w == 0), None)

    # Fallback: tiny inputs, or element counts not divisible by 128 (padding +
    # slicing would ~3x the HBM traffic of a memory-bound op; XLA's fused
    # elementwise chain already hits the roofline there).
    if width is None or total < min_pallas_elements:
        return _weighted_mae_jnp(
            prediction, target, epsilon=epsilon, only_target_based=only_target_based
        )

    rows = total // width
    p2 = prediction.reshape(rows, width)
    t2 = target.reshape(rows, width)

    # Row tile: ~tile_elems elements per buffer; full extent when the input is
    # shorter than one tile (block == full array dim is always legal).  When
    # tiled, tile_r is a multiple of 8, and a partial last block is masked by
    # Pallas automatically.
    tile_r = min(rows, max(8, tile_elems // width))
    grid = (pl.cdiv(rows, tile_r),)

    kernel = functools.partial(
        _weighted_mae_kernel, epsilon=epsilon, only_target_based=only_target_based
    )

    itemsize = jnp.dtype(dtype).itemsize
    cost = pl.CostEstimate(
        flops=4 * total,
        transcendentals=0,
        bytes_accessed=3 * total * itemsize,
    )

    out2 = pl.pallas_call(
        kernel,
        out_shape=jax.ShapeDtypeStruct((rows, width), dtype),
        grid_spec=pltpu.PrefetchScalarGridSpec(
            num_scalar_prefetch=0,
            grid=grid,
            in_specs=[
                pl.BlockSpec((tile_r, width), lambda i: (i, 0)),
                pl.BlockSpec((tile_r, width), lambda i: (i, 0)),
            ],
            out_specs=pl.BlockSpec((tile_r, width), lambda i: (i, 0)),
        ),
        compiler_params=pltpu.CompilerParams(
            dimension_semantics=("parallel",),
            # 3 arrays x 2 buffers x ~2 MiB = ~12 MiB; 32 MiB is safe on every
            # generation (v5e/v6e: 128 MiB physical, v7x: 64 MiB physical).
            vmem_limit_bytes=32 * 1024 * 1024,
        ),
        cost_estimate=cost,
    )(p2, t2)

    return out2.reshape(orig_shape)


def _reference(prediction, target, *, epsilon=0.1, only_target_based=False):
    if only_target_based:
        weight = target + epsilon
    else:
        weight = jnp.maximum(prediction, target) + epsilon
    return weight * jnp.abs(prediction - target)


if __name__ == "__main__":
    key = jax.random.PRNGKey(0)
    k1, k2, k3, k4 = jax.random.split(key, 4)

    # Small NCHW shape consistent with an image-regression loss.
    shape = (2, 4, 16, 16)  # 2048 elements -> width 1024, rows 2
    prediction = jax.random.uniform(k1, shape, dtype=jnp.float32)
    target = jax.random.uniform(k2, shape, dtype=jnp.float32)

    # Force the Pallas path (min_pallas_elements=0) so the kernel itself runs
    # even at this small demo size.
    out = weighted_mae_loss(
        prediction, target, epsilon=0.1, only_target_based=False,
        min_pallas_elements=0,
    )
    out = jax.block_until_ready(out)
    ref = _reference(prediction, target, epsilon=0.1, only_target_based=False)
    assert out.shape == shape and out.dtype == jnp.float32
    assert jnp.allclose(out, ref, atol=1e-6, rtol=1e-6)

    # only_target_based=True branch (Pallas path).
    out_t = jax.block_until_ready(
        weighted_mae_loss(
            prediction, target, epsilon=0.1, only_target_based=True,
            min_pallas_elements=0,
        )
    )
    ref_t = _reference(prediction, target, epsilon=0.1, only_target_based=True)
    assert jnp.allclose(out_t, ref_t, atol=1e-6, rtol=1e-6)

    # Multi-grid-step path: small tile_elems forces several pipelined blocks.
    shape_big = (4, 4, 64, 64)  # 65536 elements -> rows 64, tile_r 8, 8 steps
    p_big = jax.random.uniform(k3, shape_big, dtype=jnp.float32)
    t_big = jax.random.uniform(k4, shape_big, dtype=jnp.float32)
    out_big = jax.block_until_ready(
        weighted_mae_loss(
            p_big, t_big, epsilon=0.1, min_pallas_elements=0,
            tile_elems=8 * 1024,
        )
    )
    ref_big = _reference(p_big, t_big, epsilon=0.1)
    assert out_big.shape == shape_big
    assert jnp.allclose(out_big, ref_big, atol=1e-6, rtol=1e-6)

    # Element count not divisible by 128 -> fused jnp fallback (no pad copies).
    shape_odd = (2, 3, 10, 10)
    p_odd = jax.random.uniform(k3, shape_odd, dtype=jnp.float32)
    t_odd = jax.random.uniform(k4, shape_odd, dtype=jnp.float32)
    out_odd = jax.block_until_ready(
        weighted_mae_loss(p_odd, t_odd, epsilon=0.1, min_pallas_elements=0)
    )
    ref_odd = _reference(p_odd, t_odd, epsilon=0.1)
    assert out_odd.shape == shape_odd
    assert jnp.allclose(out_odd, ref_odd, atol=1e-6, rtol=1e-6)

    # Default threshold path (tiny input -> fused jnp fallback) must agree too.
    out_fb = jax.block_until_ready(
        weighted_mae_loss(prediction, target, epsilon=0.1)
    )
    assert jnp.allclose(out_fb, ref, atol=1e-6, rtol=1e-6)

    print("KERNEL_OK")
</pallas_src>

<mosaic_0001>
module attributes {stable_mosaic.version = 11 : i64} {
  func.func @_weighted_mae_kernel(%arg0: i32, %arg1: memref<2x1024xf32, #tpu.memory_space<vmem>>, %arg2: memref<2x1024xf32, #tpu.memory_space<vmem>>, %arg3: memref<2x1024xf32, #tpu.memory_space<vmem>>) attributes {dimension_semantics = [#tpu.dimension_semantics<parallel>], iteration_bounds = array<i64: 1>, scalar_prefetch = 0 : i64, scratch_operands = 0 : i64, tpu.core_type = #tpu.core_type<tc>, window_params = [{transform_indices = @transform_0, window_bounds = array<i64: 2, 1024>}, {transform_indices = @transform_1, window_bounds = array<i64: 2, 1024>}, {transform_indices = @transform_2, window_bounds = array<i64: 2, 1024>}]} {
    %c0 = arith.constant 0 : index
    %c0_0 = arith.constant 0 : index
    %0 = vector.load %arg1[%c0, %c0_0] : memref<2x1024xf32, #tpu.memory_space<vmem>>, vector<2x1024xf32>
    %c0_1 = arith.constant 0 : index
    %c0_2 = arith.constant 0 : index
    %1 = vector.load %arg2[%c0_1, %c0_2] : memref<2x1024xf32, #tpu.memory_space<vmem>>, vector<2x1024xf32>
    %2 = arith.maximumf %0, %1 : vector<2x1024xf32>
    %cst = arith.constant 1.000000e-01 : f32
    %3 = vector.broadcast %cst : f32 to vector<2x1024xf32>
    %4 = arith.addf %2, %3 : vector<2x1024xf32>
    %5 = arith.subf %0, %1 : vector<2x1024xf32>
    %6 = math.absf %5 : vector<2x1024xf32>
    %7 = arith.mulf %4, %6 : vector<2x1024xf32>
    %c0_3 = arith.constant 0 : index
    %c0_4 = arith.constant 0 : index
    %8 = vector.load %arg3[%c0_3, %c0_4] : memref<2x1024xf32, #tpu.memory_space<vmem>>, vector<2x1024xf32>
    tpu.vector_store %arg3[%c0_3, %c0_4], %7 {strides = array<i32>} : memref<2x1024xf32, #tpu.memory_space<vmem>>, vector<2x1024xf32>,
    return
  }
  func.func @transform_0(%arg0: i32) -> (i32, i32) {
    %c0_i32 = arith.constant 0 : i32
    %c0_i32_0 = arith.constant 0 : i32
    return %arg0, %c0_i32 : i32, i32
  }
  func.func @transform_1(%arg0: i32) -> (i32, i32) {
    %c0_i32 = arith.constant 0 : i32
    %c0_i32_0 = arith.constant 0 : i32
    return %arg0, %c0_i32 : i32, i32
  }
  func.func @transform_2(%arg0: i32) -> (i32, i32) {
    %c0_i32 = arith.constant 0 : i32
    %c0_i32_0 = arith.constant 0 : i32
    return %arg0, %c0_i32 : i32, i32
  }
}

</mosaic_0001>

<llo_original>
// kernel: tpu_custom_call.1
$region0: #{tpu_custom_call.1}
  #allocation0 [shape = 'u32[]', space=smem, size = 0x4, offset = 0x4, fixed_abs, tag = 'smem constant byte address 0x4 - core index']
  #allocation1 [shape = 'u32[144,128]{1,0:T(1,128)}', space=vmem, size = 0x12000, scoped, tag = 'internal scratch']
  %s0 = inlined_call_operand.hbm [shape: f32[2,1024], index: 0, kind: input, shape index: {}]
  %s1 = inlined_call_operand.hbm [shape: f32[2,1024], index: 1, kind: input, shape index: {}]
  %s2 = inlined_call_operand.hbm [shape: f32[2,1024], index: 2, kind: output, shape index: {}]
  %s3 = sld [smem:[#allocation0]]
  $region26: #{tpu_custom_call.1} parent=0
    _
  %s5 = ssub.s32 1, %s3
  %s6 = scalar_select 0, %s5, %s3
  $region1: #{tpu_custom_call.1} parent=0
    #allocation2 [shape = 'u8[8192]{0}', space=vmem, size = 0x2000, scoped, tag = 'input window, operand 0, single buffered']
    #allocation3 [shape = 's32[1]{0}', space=sflag, size = 0x4, scoped, tag = 'scoped memory for tpu_custom_call.1']
    #allocation4 [shape = 's32[1]{0}', space=sflag, size = 0x4, scoped, tag = 'scoped memory for tpu_custom_call.1']
    #allocation5 [shape = 'u8[8192]{0}', space=vmem, size = 0x2000, scoped, tag = 'input window, operand 1, single buffered']
    #allocation6 [shape = 's32[1]{0}', space=sflag, size = 0x4, scoped, tag = 'scoped memory for tpu_custom_call.1']
    #allocation7 [shape = 'u8[8192]{0}', space=vmem, size = 0x2000, scoped, tag = 'output window, operand 0, single buffered']
    %7 = vsyncpa [#allocation3], 0
    %8 = vsyncpa [#allocation6], 0
    %9 = vsyncpa [#allocation4], 0
    // Predicated region
    $region2: #{tpu_custom_call.1} parent=1 // pred_check
      _
    $region3: #{tpu_custom_call.1} parent=1 // pred_check_branch
      %11 = sbr.rel (0) target = $region5
    $region4: #{tpu_custom_call.1} parent=1 // pred_region
      %s13 = ssub.s32 256, 256
      %14 = vsyncadd [#allocation3], %s13
      %s16 = sshll.u32 [#allocation2], 4
      %s17 = int_to_ptr.vmem [resolvable:$true] %s16
      %19 = dma.hbm_to_vmem [thread:$0]  %s0, 256, %s17, [#allocation3]
    $region5: #{tpu_custom_call.1} parent=1 // pred_fallthru
      _
    // Predicated region
    $region6: #{tpu_custom_call.1} parent=1 // pred_check
      _
    $region7: #{tpu_custom_call.1} parent=1 // pred_check_branch
      %21 = sbr.rel (0) target = $region9
    $region8: #{tpu_custom_call.1} parent=1 // pred_region
      %s23 = ssub.s32 256, 256
      %24 = vsyncadd [#allocation6], %s23
      %s26 = sshll.u32 [#allocation5], 4
      %s27 = int_to_ptr.vmem [resolvable:$true] %s26
      %29 = dma.hbm_to_vmem [thread:$0]  %s1, 256, %s27, [#allocation6]
    $region9: #{tpu_custom_call.1} parent=1 // pred_fallthru
      _
    // Predicated region
    $region10: #{tpu_custom_call.1} parent=1 // pred_check
      _
    $region11: #{tpu_custom_call.1} parent=1 // pred_check_branch
      %31 = sbr.rel (0) target = $region13
    $region12: #{tpu_custom_call.1} parent=1 // pred_region
      %32 = dma.done [#allocation3], 256
    $region13: #{tpu_custom_call.1} parent=1 // pred_fallthru
      _
    // Predicated region
    $region14: #{tpu_custom_call.1} parent=1 // pred_check
      _
    $region15: #{tpu_custom_call.1} parent=1 // pred_check_branch
      %34 = sbr.rel (0) target = $region17
    $region16: #{tpu_custom_call.1} parent=1 // pred_region
      %35 = dma.done [#allocation6], 256
    $region17: #{tpu_custom_call.1} parent=1 // pred_fallthru
      _
    %v36 = vld [vmem:[#allocation2] sm:$0xff]
    %v37 = vld [vmem:[#allocation2 + $0x8] sm:$0xff]
    %v38 = vld [vmem:[#allocation5] sm:$0xff]
    %v39 = vld [vmem:[#allocation5 + $0x8] sm:$0xff]
    %v40 = vmax.f32 %v36, %v38
    %v41 = vmax.f32 %v37, %v39
    %v42 = vadd.f32 %v40, 0.1
    %v43 = vadd.f32 %v41, 0.1
    %v44 = vsub.f32 %v36, %v38
    %v45 = vsub.f32 %v37, %v39
    %v46 = vand.u32 2147483647, %v44
    %v47 = vand.u32 2147483647, %v45
    %v48 = vmul.f32 %v42, %v46
    %v49 = vmul.f32 %v43, %v47
    %50 = vst [vmem:[#allocation7] sm:$0xff] %v48
    %51 = vst [vmem:[#allocation7 + $0x8] sm:$0xff] %v49
    // Predicated region
    $region18: #{tpu_custom_call.1} parent=1 // pred_check
      _
    $region19: #{tpu_custom_call.1} parent=1 // pred_check_branch
      %53 = sbr.rel (0) target = $region21
    $region20: #{tpu_custom_call.1} parent=1 // pred_region
      %s55 = ssub.s32 256, 256
      %56 = vsyncadd [#allocation4], %s55
      %s58 = sshll.u32 [#allocation7], 4
      %s59 = int_to_ptr.vmem [resolvable:$true] %s58
      %61 = dma.vmem_to_hbm [thread:$0]  %s59, 256, %s2, [#allocation4]
    $region21: #{tpu_custom_call.1} parent=1 // pred_fallthru
      _
    // Predicated region
    $region22: #{tpu_custom_call.1} parent=1 // pred_check
      _
    $region23: #{tpu_custom_call.1} parent=1 // pred_check_branch
      %63 = sbr.rel (0) target = $region25
    $region24: #{tpu_custom_call.1} parent=1 // pred_region
      %64 = dma.done [#allocation4], 256
    $region25: #{tpu_custom_call.1} parent=1 // pred_fallthru
      _
    %65 = vsyncpa [#allocation3], 1
    %66 = vsyncpa [#allocation6], 1
    %67 = vsyncpa [#allocation4], 1

</llo_original>
